<compile_context>
chip_gen: v7x
topology: tpu7x:2x2x1
jax: 0.10.0
libtpu: 0.0.40
codegen_flags: <defaults>
</compile_context>

<pallas_src>
import functools

import jax
import jax.numpy as jnp
import numpy as np
from jax.experimental import pallas as pl
from jax.experimental.pallas import tpu as pltpu


def _round_up(v, m):
    return ((v + m - 1) // m) * m


_MAX_LANES = 4096  # cap per-grid-step lane width so patches + masks stay well under VMEM


def _pick_grid(n, l):
    """Number of grid steps G; each step stacks n // G images along the lane axis."""
    try:
        dual_core = "v7" in jax.devices()[0].device_kind.lower()
    except Exception:
        dual_core = False
    # v7x: 2 TensorCores -> keep >= 2 'parallel' grid steps so both get work.
    # v5e/v6e: 1 TensorCore -> collapse the batch onto lanes (fewer, wider steps).
    g = 2 if (dual_core and n >= 2 and n % 2 == 0) else 1
    while g < n and (n % g != 0 or (n // g) * l > _MAX_LANES):
        g += 1
    # TODO(synk): for n == 1 on v7x, split H into two halo'd halves so the
    # second TensorCore is not idle.
    return g


def _build_masks_np(H, W, K, n_imgs, rows):
    """Per-tap border masks, tiled over the images stacked on the lane axis and
    pre-expanded over `rows` sublanes so masking is a plain full-tile multiply."""
    P = K // 2
    yy, xx = np.meshgrid(np.arange(H), np.arange(W), indexing="ij")
    m = np.empty((K * K, H * W), np.float32)
    for dy in range(K):
        for dx in range(K):
            ok = ((yy + dy - P >= 0) & (yy + dy - P < H) &
                  (xx + dx - P >= 0) & (xx + dx - P < W))
            m[dy * K + dx] = ok.reshape(-1).astype(np.float32)
    m = np.tile(m, (1, n_imgs))                                   # (K*K, n_imgs*H*W)
    return np.broadcast_to(m[:, None, :], (K * K, rows, m.shape[1])).copy()


def _make_kernel(H, W, K):
    """Kernel body. Channels on sublanes, flattened (imgs * H * W) on lanes."""
    P = K // 2

    def _shift(a, off):
        # shifted[:, q] = a[:, (q + off) mod Lb]   (off may be negative)
        lb = a.shape[-1]
        s = (-off) % lb
        return a if s == 0 else pltpu.roll(a, s, axis=1)

    def _im2col(a, masks_ref):
        # (C, Lb) -> (K*K*C, Lb) patch matrix.  Each tap is a lane rotation
        # (XLU, off the VALU/vst path); border positions (including every lane
        # where the roll would wrap into a neighbouring image on the lane axis)
        # are zeroed by the pre-expanded static masks, so each conv collapses
        # to a single MXU matmul.
        pieces = []
        for dy in range(K):
            for dx in range(K):
                t = dy * K + dx
                off = (dy - P) * W + (dx - P)
                piece = _shift(a, off)
                if not (dy == P and dx == P):      # centre tap never out of bounds
                    piece = masks_ref[t] * piece
                pieces.append(piece)
        return jnp.concatenate(pieces, axis=0)

    def kernel(x_ref, h_ref, w1_ref, b1_ref, w2_ref, b2_ref, m1_ref, m2_ref,
               out_ref, st_ref):
        # Fuse input + hidden channels on sublanes (both already 8-padded).
        xh = jnp.concatenate([x_ref[0], h_ref[0]], axis=0)            # (C1r, Lb)

        # state = tanh(ff(x) + rec(h)): ONE fused MXU matmul over all taps.
        p1 = _im2col(xh, m1_ref)                                      # (K*K*C1r, Lb)
        z = jnp.dot(w1_ref[...], p1,
                    preferred_element_type=jnp.float32) + b1_ref[...]
        state = jnp.tanh(z)                                           # (Cop, Lb); pad rows stay 0
        st_ref[0] = state.astype(st_ref.dtype)                        # full 8-sublane tile store

        # out = relu(out_conv(state)): second fused MXU matmul.
        p2 = _im2col(state, m2_ref)                                   # (K*K*Cop, Lb)
        o = jnp.dot(w2_ref[...], p2,
                    preferred_element_type=jnp.float32) + b2_ref[...]
        out_ref[0] = jnp.maximum(o, 0.0).astype(out_ref.dtype)        # full 8-sublane tile store

    return kernel


def _pack_params(w_ff, b_ff, w_rec, b_rec, w_out, b_out):
    """ONE-TIME weight repacking into 2-D, sublane-aligned matmul matrices.
    Column layout of w1, per tap t=(dy*K+dx): [Cinp input chans ; Cop hidden chans]."""
    Chid, Cin, K, _ = w_ff.shape
    Cinp = _round_up(Cin, 8)
    Cop = _round_up(Chid, 8)
    C1r = Cinp + Cop
    KK = K * K

    w_ff_p = jnp.pad(w_ff, ((0, 0), (0, Cinp - Cin), (0, 0), (0, 0)))
    w_rec_p = jnp.pad(w_rec, ((0, 0), (0, Cop - Chid), (0, 0), (0, 0)))
    w1 = jnp.concatenate([w_ff_p, w_rec_p], axis=1)                   # (Chid, C1r, K, K)
    w1 = jnp.transpose(w1, (0, 2, 3, 1))                              # (Chid, K, K, C1r)
    w1 = jnp.pad(w1, ((0, Cop - Chid), (0, 0), (0, 0), (0, 0)))
    w1 = w1.reshape(Cop, KK * C1r)
    b1 = jnp.pad(b_ff + b_rec, (0, Cop - Chid)).reshape(Cop, 1)

    w2 = jnp.pad(w_out, ((0, 0), (0, Cop - Chid), (0, 0), (0, 0)))    # (Chid, Cop, K, K)
    w2 = jnp.transpose(w2, (0, 2, 3, 1))                              # (Chid, K, K, Cop)
    w2 = jnp.pad(w2, ((0, Cop - Chid), (0, 0), (0, 0), (0, 0)))
    w2 = w2.reshape(Cop, KK * Cop)
    b2 = jnp.pad(b_out, (0, Cop - Chid)).reshape(Cop, 1)
    return (w1, b1, w2, b2)


@functools.lru_cache(maxsize=None)
def _get_step(N, Cin, Chid, H, W, K, G, dtype):
    """Builds masks + pallas_call once per shape signature; returns a jitted step."""
    assert N % G == 0
    Nc = N // G                      # images stacked on lanes per grid step
    L = H * W
    Lb = Nc * L
    Cinp = _round_up(Cin, 8)
    Cop = _round_up(Chid, 8)
    C1r = Cinp + Cop
    KK = K * K
    P = K // 2
    # roll + static-mask border handling assumes an odd kernel smaller than the image
    assert K % 2 == 1 and P < min(H, W), "unsupported kernel/image size for roll-based im2col"

    masks1 = jnp.asarray(_build_masks_np(H, W, K, Nc, C1r))           # (KK, C1r, Lb)
    masks2 = jnp.asarray(_build_masks_np(H, W, K, Nc, Cop))           # (KK, Cop, Lb)

    kernel = _make_kernel(H, W, K)
    const2 = lambda g: (0, 0)
    const3 = lambda g: (0, 0, 0)

    call = pl.pallas_call(
        kernel,
        out_shape=(jax.ShapeDtypeStruct((G, Cop, Lb), dtype),
                   jax.ShapeDtypeStruct((G, Cop, Lb), dtype)),
        grid=(G,),
        in_specs=[
            pl.BlockSpec((1, Cinp, Lb), lambda g: (g, 0, 0)),         # x (packed)
            pl.BlockSpec((1, Cop, Lb), lambda g: (g, 0, 0)),          # prev_state (packed)
            pl.BlockSpec((Cop, KK * C1r), const2),                    # w1
            pl.BlockSpec((Cop, 1), const2),                           # b1
            pl.BlockSpec((Cop, KK * Cop), const2),                    # w2
            pl.BlockSpec((Cop, 1), const2),                           # b2
            pl.BlockSpec((KK, C1r, Lb), const3),                      # masks1
            pl.BlockSpec((KK, Cop, Lb), const3),                      # masks2
        ],
        out_specs=(pl.BlockSpec((1, Cop, Lb), lambda g: (g, 0, 0)),   # out
                   pl.BlockSpec((1, Cop, Lb), lambda g: (g, 0, 0))),  # state
        input_output_aliases={1: 1},   # prev_state buffer reused in place for new state
        compiler_params=pltpu.CompilerParams(
            dimension_semantics=("parallel",)),
    )

    def _pack(a, cp):                  # (N, C, H, W) -> (G, cp, Lb)
        c = a.shape[1]
        q = a.reshape(G, Nc, c, L)
        q = jnp.transpose(q, (0, 2, 1, 3)).reshape(G, c, Lb)
        return jnp.pad(q, ((0, 0), (0, cp - c), (0, 0)))

    def _unpack(p):                    # (G, Cop, Lb) -> (N, Chid, H, W)
        q = p.reshape(G, Cop, Nc, L)
        q = jnp.transpose(q, (0, 2, 1, 3)).reshape(N, Cop, H, W)
        return q[:, :Chid]

    def step(x, prev_state, w1, b1, w2, b2):
        x_p = _pack(x, Cinp)
        if prev_state is None:
            h_p = jnp.zeros((G, Cop, Lb), x.dtype)
        else:
            h_p = _pack(prev_state, Cop)
        out_p, st_p = call(x_p, h_p, w1, b1, w2, b2, masks1, masks2)
        return _unpack(out_p), _unpack(st_p)

    return jax.jit(step)


class ConvRecurrentTPU:
    """Pallas-TPU ConvRecurrent cell:  out, state = cell(x, prev_state)."""

    def __init__(self, w_ff, b_ff, w_rec, b_rec, w_out, b_out):
        Chid, Cin, K, K2 = w_ff.shape
        assert K == K2
        # rec/out convs are applied to the hidden state -> input_size == hidden_size
        assert w_rec.shape == (Chid, Chid, K, K)
        assert w_out.shape == (Chid, Chid, K, K)
        self.Cin, self.Chid, self.K = Cin, Chid, K
        # one-time weight repacking, hoisted out of the per-step hot path
        self.packed = _pack_params(w_ff, b_ff, w_rec, b_rec, w_out, b_out)

    def __call__(self, x, prev_state=None):
        N, Cin, H, W = x.shape
        assert Cin == self.Cin
        G = _pick_grid(N, H * W)
        step = _get_step(N, Cin, self.Chid, H, W, self.K, G, np.dtype(x.dtype))
        return step(x, prev_state, *self.packed)


# ------------------------------ pure-JAX reference --------------------------
def _conv2d_nchw(x, w, b):
    y = jax.lax.conv_general_dilated(
        x, w, window_strides=(1, 1), padding="SAME",
        dimension_numbers=("NCHW", "OIHW", "NCHW"))
    return y + b.reshape(1, -1, 1, 1)


def _reference(x, h, w_ff, b_ff, w_rec, b_rec, w_out, b_out):
    ff = _conv2d_nchw(x, w_ff, b_ff)
    rec = _conv2d_nchw(h, w_rec, b_rec)
    state = jnp.tanh(ff + rec)
    out = jax.nn.relu(_conv2d_nchw(state, w_out, b_out))
    return out, state


if __name__ == "__main__":
    # Module constraint: rec/out convs take `input_size` in-channels but are
    # applied to the hidden state, so input_size must equal hidden_size.
    N, C, Hid, H, W, K = 2, 4, 4, 16, 16, 3

    key = jax.random.PRNGKey(0)
    k_x, k1, k2, k3, k4, k5, k6 = jax.random.split(key, 7)

    x = jax.random.normal(k_x, (N, C, H, W), jnp.float32)
    w_ff = 0.1 * jax.random.normal(k1, (Hid, C, K, K), jnp.float32)
    b_ff = 0.1 * jax.random.normal(k2, (Hid,), jnp.float32)
    w_rec = 0.1 * jax.random.normal(k3, (Hid, Hid, K, K), jnp.float32)
    b_rec = 0.1 * jax.random.normal(k4, (Hid,), jnp.float32)
    w_out = 0.1 * jax.random.normal(k5, (Hid, Hid, K, K), jnp.float32)
    b_out = 0.1 * jax.random.normal(k6, (Hid,), jnp.float32)

    cell = ConvRecurrentTPU(w_ff, b_ff, w_rec, b_rec, w_out, b_out)   # one-time packing

    # step 1: prev_state = None -> zeros
    out, state = cell(x, None)
    jax.block_until_ready((out, state))

    zeros_state = jnp.zeros((N, Hid, H, W), jnp.float32)
    out_ref, state_ref = _reference(x, zeros_state, w_ff, b_ff, w_rec, b_rec,
                                    w_out, b_out)
    np.testing.assert_allclose(np.asarray(out), np.asarray(out_ref),
                               rtol=1e-5, atol=1e-5)
    np.testing.assert_allclose(np.asarray(state), np.asarray(state_ref),
                               rtol=1e-5, atol=1e-5)

    # step 2: exercise the recurrent (prev_state != None) path
    out2, state2 = cell(x, state)
    jax.block_until_ready((out2, state2))
    out2_ref, state2_ref = _reference(x, state, w_ff, b_ff, w_rec, b_rec,
                                      w_out, b_out)
    np.testing.assert_allclose(np.asarray(out2), np.asarray(out2_ref),
                               rtol=1e-5, atol=1e-5)
    np.testing.assert_allclose(np.asarray(state2), np.asarray(state2_ref),
                               rtol=1e-5, atol=1e-5)

    print("KERNEL_OK")
</pallas_src>

<mosaic_0001>
module attributes {stable_mosaic.version = 11 : i64} {
  func.func @kernel(%arg0: i32, %arg1: memref<1x8x512xf32, #tpu.memory_space<vmem>>, %arg2: memref<1x8x512xf32, #tpu.memory_space<vmem>>, %arg3: memref<8x144xf32, #tpu.memory_space<vmem>>, %arg4: memref<8x1xf32, #tpu.memory_space<vmem>>, %arg5: memref<8x72xf32, #tpu.memory_space<vmem>>, %arg6: memref<8x1xf32, #tpu.memory_space<vmem>>, %arg7: memref<9x16x512xf32, #tpu.memory_space<vmem>>, %arg8: memref<9x8x512xf32, #tpu.memory_space<vmem>>, %arg9: memref<1x8x512xf32, #tpu.memory_space<vmem>>, %arg10: memref<1x8x512xf32, #tpu.memory_space<vmem>>) attributes {dimension_semantics = [#tpu.dimension_semantics<parallel>], iteration_bounds = array<i64: 1>, scalar_prefetch = 0 : i64, scratch_operands = 0 : i64, tpu.core_type = #tpu.core_type<tc>, window_params = [{transform_indices = @transform_0, window_bounds = array<i64: 1, 8, 512>}, {transform_indices = @transform_1, window_bounds = array<i64: 1, 8, 512>}, {pipeline_mode = #tpu.pipeline_mode<synchronous>, transform_indices = @transform_2, window_bounds = array<i64: 8, 144>}, {pipeline_mode = #tpu.pipeline_mode<synchronous>, transform_indices = @transform_3, window_bounds = array<i64: 8, 1>}, {pipeline_mode = #tpu.pipeline_mode<synchronous>, transform_indices = @transform_4, window_bounds = array<i64: 8, 72>}, {pipeline_mode = #tpu.pipeline_mode<synchronous>, transform_indices = @transform_5, window_bounds = array<i64: 8, 1>}, {pipeline_mode = #tpu.pipeline_mode<synchronous>, transform_indices = @transform_6, window_bounds = array<i64: 9, 16, 512>}, {pipeline_mode = #tpu.pipeline_mode<synchronous>, transform_indices = @transform_7, window_bounds = array<i64: 9, 8, 512>}, {transform_indices = @transform_8, window_bounds = array<i64: 1, 8, 512>}, {transform_indices = @transform_9, window_bounds = array<i64: 1, 8, 512>}]} {
    %c0 = arith.constant 0 : index
    %c0_0 = arith.constant 0 : index
    %c0_1 = arith.constant 0 : index
    %0 = vector.load %arg1[%c0, %c0_0, %c0_1] : memref<1x8x512xf32, #tpu.memory_space<vmem>>, vector<1x8x512xf32>
    %1 = vector.shape_cast %0 : vector<1x8x512xf32> to vector<8x512xf32>
    %c0_2 = arith.constant 0 : index
    %c0_3 = arith.constant 0 : index
    %c0_4 = arith.constant 0 : index
    %2 = vector.load %arg2[%c0_2, %c0_3, %c0_4] : memref<1x8x512xf32, #tpu.memory_space<vmem>>, vector<1x8x512xf32>
    %3 = vector.shape_cast %2 : vector<1x8x512xf32> to vector<8x512xf32>
    %4 = tpu.concatenate %1, %3 in 0 : vector<8x512xf32>, vector<8x512xf32> -> vector<16x512xf32>
    %c17_i32 = arith.constant 17 : i32
    %5 = tpu.dynamic_rotate %4 by %c17_i32 dim 1 : vector<16x512xf32>, i32 -> vector<16x512xf32>
    %c0_5 = arith.constant 0 : index
    %c0_6 = arith.constant 0 : index
    %c0_7 = arith.constant 0 : index
    %6 = vector.load %arg7[%c0_5, %c0_6, %c0_7] : memref<9x16x512xf32, #tpu.memory_space<vmem>>, vector<1x16x512xf32>
    %7 = vector.shape_cast %6 : vector<1x16x512xf32> to vector<16x512xf32>
    %8 = arith.mulf %7, %5 : vector<16x512xf32>
    %c16_i32 = arith.constant 16 : i32
    %9 = tpu.dynamic_rotate %4 by %c16_i32 dim 1 : vector<16x512xf32>, i32 -> vector<16x512xf32>
    %c1 = arith.constant 1 : index
    %c0_8 = arith.constant 0 : index
    %c0_9 = arith.constant 0 : index
    %10 = vector.load %arg7[%c1, %c0_8, %c0_9] : memref<9x16x512xf32, #tpu.memory_space<vmem>>, vector<1x16x512xf32>
    %11 = vector.shape_cast %10 : vector<1x16x512xf32> to vector<16x512xf32>
    %12 = arith.mulf %11, %9 : vector<16x512xf32>
    %c15_i32 = arith.constant 15 : i32
    %13 = tpu.dynamic_rotate %4 by %c15_i32 dim 1 : vector<16x512xf32>, i32 -> vector<16x512xf32>
    %c2 = arith.constant 2 : index
    %c0_10 = arith.constant 0 : index
    %c0_11 = arith.constant 0 : index
    %14 = vector.load %arg7[%c2, %c0_10, %c0_11] : memref<9x16x512xf32, #tpu.memory_space<vmem>>, vector<1x16x512xf32>
    %15 = vector.shape_cast %14 : vector<1x16x512xf32> to vector<16x512xf32>
    %16 = arith.mulf %15, %13 : vector<16x512xf32>
    %c1_i32 = arith.constant 1 : i32
    %17 = tpu.dynamic_rotate %4 by %c1_i32 dim 1 : vector<16x512xf32>, i32 -> vector<16x512xf32>
    %c3 = arith.constant 3 : index
    %c0_12 = arith.constant 0 : index
    %c0_13 = arith.constant 0 : index
    %18 = vector.load %arg7[%c3, %c0_12, %c0_13] : memref<9x16x512xf32, #tpu.memory_space<vmem>>, vector<1x16x512xf32>
    %19 = vector.shape_cast %18 : vector<1x16x512xf32> to vector<16x512xf32>
    %20 = arith.mulf %19, %17 : vector<16x512xf32>
    %c511_i32 = arith.constant 511 : i32
    %21 = tpu.dynamic_rotate %4 by %c511_i32 dim 1 : vector<16x512xf32>, i32 -> vector<16x512xf32>
    %c5 = arith.constant 5 : index
    %c0_14 = arith.constant 0 : index
    %c0_15 = arith.constant 0 : index
    %22 = vector.load %arg7[%c5, %c0_14, %c0_15] : memref<9x16x512xf32, #tpu.memory_space<vmem>>, vector<1x16x512xf32>
    %23 = vector.shape_cast %22 : vector<1x16x512xf32> to vector<16x512xf32>
    %24 = arith.mulf %23, %21 : vector<16x512xf32>
    %c497_i32 = arith.constant 497 : i32
    %25 = tpu.dynamic_rotate %4 by %c497_i32 dim 1 : vector<16x512xf32>, i32 -> vector<16x512xf32>
    %c6 = arith.constant 6 : index
    %c0_16 = arith.constant 0 : index
    %c0_17 = arith.constant 0 : index
    %26 = vector.load %arg7[%c6, %c0_16, %c0_17] : memref<9x16x512xf32, #tpu.memory_space<vmem>>, vector<1x16x512xf32>
    %27 = vector.shape_cast %26 : vector<1x16x512xf32> to vector<16x512xf32>
    %28 = arith.mulf %27, %25 : vector<16x512xf32>
    %c496_i32 = arith.constant 496 : i32
    %29 = tpu.dynamic_rotate %4 by %c496_i32 dim 1 : vector<16x512xf32>, i32 -> vector<16x512xf32>
    %c7 = arith.constant 7 : index
    %c0_18 = arith.constant 0 : index
    %c0_19 = arith.constant 0 : index
    %30 = vector.load %arg7[%c7, %c0_18, %c0_19] : memref<9x16x512xf32, #tpu.memory_space<vmem>>, vector<1x16x512xf32>
    %31 = vector.shape_cast %30 : vector<1x16x512xf32> to vector<16x512xf32>
    %32 = arith.mulf %31, %29 : vector<16x512xf32>
    %c495_i32 = arith.constant 495 : i32
    %33 = tpu.dynamic_rotate %4 by %c495_i32 dim 1 : vector<16x512xf32>, i32 -> vector<16x512xf32>
    %c8 = arith.constant 8 : index
    %c0_20 = arith.constant 0 : index
    %c0_21 = arith.constant 0 : index
    %34 = vector.load %arg7[%c8, %c0_20, %c0_21] : memref<9x16x512xf32, #tpu.memory_space<vmem>>, vector<1x16x512xf32>
    %35 = vector.shape_cast %34 : vector<1x16x512xf32> to vector<16x512xf32>
    %36 = arith.mulf %35, %33 : vector<16x512xf32>
    %37 = tpu.concatenate %8, %12, %16, %20, %4, %24, %28, %32, %36 in 0 : vector<16x512xf32>, vector<16x512xf32>, vector<16x512xf32>, vector<16x512xf32>, vector<16x512xf32>, vector<16x512xf32>, vector<16x512xf32>, vector<16x512xf32>, vector<16x512xf32> -> vector<144x512xf32>
    %c0_22 = arith.constant 0 : index
    %c0_23 = arith.constant 0 : index
    %38 = vector.load %arg3[%c0_22, %c0_23] : memref<8x144xf32, #tpu.memory_space<vmem>>, vector<8x144xf32>
    %cst = arith.constant dense<0.000000e+00> : vector<8x512xf32>
    %39 = tpu.matmul %38, %37, %cst {dimension_numbers = #tpu.dot_dimension_numbers<[1], [0], [0], [1], [0, 0, 1, 1], [], []>} : vector<8x144xf32>, vector<144x512xf32>, vector<8x512xf32> -> vector<8x512xf32>
    %c0_24 = arith.constant 0 : index
    %c0_25 = arith.constant 0 : index
    %40 = vector.load %arg4[%c0_24, %c0_25] : memref<8x1xf32, #tpu.memory_space<vmem>>, vector<8x1xf32>
    %41 = vector.broadcast %40 : vector<8x1xf32> to vector<8x512xf32>
    %42 = arith.addf %39, %41 : vector<8x512xf32>
    %43 = math.tanh %42 : vector<8x512xf32>
    %c0_26 = arith.constant 0 : index
    %c0_27 = arith.constant 0 : index
    %c0_28 = arith.constant 0 : index
    %44 = vector.load %arg10[%c0_26, %c0_27, %c0_28] : memref<1x8x512xf32, #tpu.memory_space<vmem>>, vector<1x8x512xf32>
    %45 = vector.shape_cast %44 : vector<1x8x512xf32> to vector<8x512xf32>
    %46 = vector.shape_cast %43 : vector<8x512xf32> to vector<1x8x512xf32>
    tpu.vector_store %arg10[%c0_26, %c0_27, %c0_28], %46 {strides = array<i32>} : memref<1x8x512xf32, #tpu.memory_space<vmem>>, vector<1x8x512xf32>,
    %c17_i32_29 = arith.constant 17 : i32
    %47 = tpu.dynamic_rotate %43 by %c17_i32_29 dim 1 : vector<8x512xf32>, i32 -> vector<8x512xf32>
    %c0_30 = arith.constant 0 : index
    %c0_31 = arith.constant 0 : index
    %c0_32 = arith.constant 0 : index
    %48 = vector.load %arg8[%c0_30, %c0_31, %c0_32] : memref<9x8x512xf32, #tpu.memory_space<vmem>>, vector<1x8x512xf32>
    %49 = vector.shape_cast %48 : vector<1x8x512xf32> to vector<8x512xf32>
    %50 = arith.mulf %49, %47 : vector<8x512xf32>
    %c16_i32_33 = arith.constant 16 : i32
    %51 = tpu.dynamic_rotate %43 by %c16_i32_33 dim 1 : vector<8x512xf32>, i32 -> vector<8x512xf32>
    %c1_34 = arith.constant 1 : index
    %c0_35 = arith.constant 0 : index
    %c0_36 = arith.constant 0 : index
    %52 = vector.load %arg8[%c1_34, %c0_35, %c0_36] : memref<9x8x512xf32, #tpu.memory_space<vmem>>, vector<1x8x512xf32>
    %53 = vector.shape_cast %52 : vector<1x8x512xf32> to vector<8x512xf32>
    %54 = arith.mulf %53, %51 : vector<8x512xf32>
    %c15_i32_37 = arith.constant 15 : i32
    %55 = tpu.dynamic_rotate %43 by %c15_i32_37 dim 1 : vector<8x512xf32>, i32 -> vector<8x512xf32>
    %c2_38 = arith.constant 2 : index
    %c0_39 = arith.constant 0 : index
    %c0_40 = arith.constant 0 : index
    %56 = vector.load %arg8[%c2_38, %c0_39, %c0_40] : memref<9x8x512xf32, #tpu.memory_space<vmem>>, vector<1x8x512xf32>
    %57 = vector.shape_cast %56 : vector<1x8x512xf32> to vector<8x512xf32>
    %58 = arith.mulf %57, %55 : vector<8x512xf32>
    %c1_i32_41 = arith.constant 1 : i32
    %59 = tpu.dynamic_rotate %43 by %c1_i32_41 dim 1 : vector<8x512xf32>, i32 -> vector<8x512xf32>
    %c3_42 = arith.constant 3 : index
    %c0_43 = arith.constant 0 : index
    %c0_44 = arith.constant 0 : index
    %60 = vector.load %arg8[%c3_42, %c0_43, %c0_44] : memref<9x8x512xf32, #tpu.memory_space<vmem>>, vector<1x8x512xf32>
    %61 = vector.shape_cast %60 : vector<1x8x512xf32> to vector<8x512xf32>
    %62 = arith.mulf %61, %59 : vector<8x512xf32>
    %c511_i32_45 = arith.constant 511 : i32
    %63 = tpu.dynamic_rotate %43 by %c511_i32_45 dim 1 : vector<8x512xf32>, i32 -> vector<8x512xf32>
    %c5_46 = arith.constant 5 : index
    %c0_47 = arith.constant 0 : index
    %c0_48 = arith.constant 0 : index
    %64 = vector.load %arg8[%c5_46, %c0_47, %c0_48] : memref<9x8x512xf32, #tpu.memory_space<vmem>>, vector<1x8x512xf32>
    %65 = vector.shape_cast %64 : vector<1x8x512xf32> to vector<8x512xf32>
    %66 = arith.mulf %65, %63 : vector<8x512xf32>
    %c497_i32_49 = arith.constant 497 : i32
    %67 = tpu.dynamic_rotate %43 by %c497_i32_49 dim 1 : vector<8x512xf32>, i32 -> vector<8x512xf32>
    %c6_50 = arith.constant 6 : index
    %c0_51 = arith.constant 0 : index
    %c0_52 = arith.constant 0 : index
    %68 = vector.load %arg8[%c6_50, %c0_51, %c0_52] : memref<9x8x512xf32, #tpu.memory_space<vmem>>, vector<1x8x512xf32>
    %69 = vector.shape_cast %68 : vector<1x8x512xf32> to vector<8x512xf32>
    %70 = arith.mulf %69, %67 : vector<8x512xf32>
    %c496_i32_53 = arith.constant 496 : i32
    %71 = tpu.dynamic_rotate %43 by %c496_i32_53 dim 1 : vector<8x512xf32>, i32 -> vector<8x512xf32>
    %c7_54 = arith.constant 7 : index
    %c0_55 = arith.constant 0 : index
    %c0_56 = arith.constant 0 : index
    %72 = vector.load %arg8[%c7_54, %c0_55, %c0_56] : memref<9x8x512xf32, #tpu.memory_space<vmem>>, vector<1x8x512xf32>
    %73 = vector.shape_cast %72 : vector<1x8x512xf32> to vector<8x512xf32>
    %74 = arith.mulf %73, %71 : vector<8x512xf32>
    %c495_i32_57 = arith.constant 495 : i32
    %75 = tpu.dynamic_rotate %43 by %c495_i32_57 dim 1 : vector<8x512xf32>, i32 -> vector<8x512xf32>
    %c8_58 = arith.constant 8 : index
    %c0_59 = arith.constant 0 : index
    %c0_60 = arith.constant 0 : index
    %76 = vector.load %arg8[%c8_58, %c0_59, %c0_60] : memref<9x8x512xf32, #tpu.memory_space<vmem>>, vector<1x8x512xf32>
    %77 = vector.shape_cast %76 : vector<1x8x512xf32> to vector<8x512xf32>
    %78 = arith.mulf %77, %75 : vector<8x512xf32>
    %79 = tpu.concatenate %50, %54, %58, %62, %43, %66, %70, %74, %78 in 0 : vector<8x512xf32>, vector<8x512xf32>, vector<8x512xf32>, vector<8x512xf32>, vector<8x512xf32>, vector<8x512xf32>, vector<8x512xf32>, vector<8x512xf32>, vector<8x512xf32> -> vector<72x512xf32>
    %c0_61 = arith.constant 0 : index
    %c0_62 = arith.constant 0 : index
    %80 = vector.load %arg5[%c0_61, %c0_62] : memref<8x72xf32, #tpu.memory_space<vmem>>, vector<8x72xf32>
    %cst_63 = arith.constant dense<0.000000e+00> : vector<8x512xf32>
    %81 = tpu.matmul %80, %79, %cst_63 {dimension_numbers = #tpu.dot_dimension_numbers<[1], [0], [0], [1], [0, 0, 1, 1], [], []>} : vector<8x72xf32>, vector<72x512xf32>, vector<8x512xf32> -> vector<8x512xf32>
    %c0_64 = arith.constant 0 : index
    %c0_65 = arith.constant 0 : index
    %82 = vector.load %arg6[%c0_64, %c0_65] : memref<8x1xf32, #tpu.memory_space<vmem>>, vector<8x1xf32>
    %83 = vector.broadcast %82 : vector<8x1xf32> to vector<8x512xf32>
    %84 = arith.addf %81, %83 : vector<8x512xf32>
    %cst_66 = arith.constant 0.000000e+00 : f32
    %85 = vector.broadcast %cst_66 : f32 to vector<8x512xf32>
    %86 = arith.maximumf %84, %85 : vector<8x512xf32>
    %c0_67 = arith.constant 0 : index
    %c0_68 = arith.constant 0 : index
    %c0_69 = arith.constant 0 : index
    %87 = vector.load %arg9[%c0_67, %c0_68, %c0_69] : memref<1x8x512xf32, #tpu.memory_space<vmem>>, vector<1x8x512xf32>
    %88 = vector.shape_cast %87 : vector<1x8x512xf32> to vector<8x512xf32>
    %89 = vector.shape_cast %86 : vector<8x512xf32> to vector<1x8x512xf32>
    tpu.vector_store %arg9[%c0_67, %c0_68, %c0_69], %89 {strides = array<i32>} : memref<1x8x512xf32, #tpu.memory_space<vmem>>, vector<1x8x512xf32>,
    return
  }
  func.func @transform_0(%arg0: i32) -> (i32, i32, i32) {
    %c0_i32 = arith.constant 0 : i32
    %c0_i32_0 = arith.constant 0 : i32
    %c0_i32_1 = arith.constant 0 : i32
    return %arg0, %c0_i32, %c0_i32_0 : i32, i32, i32
  }
  func.func @transform_1(%arg0: i32) -> (i32, i32, i32) {
    %c0_i32 = arith.constant 0 : i32
    %c0_i32_0 = arith.constant 0 : i32
    %c0_i32_1 = arith.constant 0 : i32
    return %arg0, %c0_i32, %c0_i32_0 : i32, i32, i32
  }
  func.func @transform_2(%arg0: i32) -> (i32, i32) {
    %c0_i32 = arith.constant 0 : i32
    %c0_i32_0 = arith.constant 0 : i32
    %c0_i32_1 = arith.constant 0 : i32
    return %c0_i32, %c0_i32_0 : i32, i32
  }
  func.func @transform_3(%arg0: i32) -> (i32, i32) {
    %c0_i32 = arith.constant 0 : i32
    %c0_i32_0 = arith.constant 0 : i32
    %c0_i32_1 = arith.constant 0 : i32
    return %c0_i32, %c0_i32_0 : i32, i32
  }
  func.func @transform_4(%arg0: i32) -> (i32, i32) {
    %c0_i32 = arith.constant 0 : i32
    %c0_i32_0 = arith.constant 0 : i32
    %c0_i32_1 = arith.constant 0 : i32
    return %c0_i32, %c0_i32_0 : i32, i32
  }
  func.func @transform_5(%arg0: i32) -> (i32, i32) {
    %c0_i32 = arith.constant 0 : i32
    %c0_i32_0 = arith.constant 0 : i32
    %c0_i32_1 = arith.constant 0 : i32
    return %c0_i32, %c0_i32_0 : i32, i32
  }
  func.func @transform_6(%arg0: i32) -> (i32, i32, i32) {
    %c0_i32 = arith.constant 0 : i32
    %c0_i32_0 = arith.constant 0 : i32
    %c0_i32_1 = arith.constant 0 : i32
    %c0_i32_2 = arith.constant 0 : i32
    return %c0_i32, %c0_i32_0, %c0_i32_1 : i32, i32, i32
  }
  func.func @transform_7(%arg0: i32) -> (i32, i32, i32) {
    %c0_i32 = arith.constant 0 : i32
    %c0_i32_0 = arith.constant 0 : i32
    %c0_i32_1 = arith.constant 0 : i32
    %c0_i32_2 = arith.constant 0 : i32
    return %c0_i32, %c0_i32_0, %c0_i32_1 : i32, i32, i32
  }
  func.func @transform_8(%arg0: i32) -> (i32, i32, i32) {
    %c0_i32 = arith.constant 0 : i32
    %c0_i32_0 = arith.constant 0 : i32
    %c0_i32_1 = arith.constant 0 : i32
    return %arg0, %c0_i32, %c0_i32_0 : i32, i32, i32
  }
  func.func @transform_9(%arg0: i32) -> (i32, i32, i32) {
    %c0_i32 = arith.constant 0 : i32
    %c0_i32_0 = arith.constant 0 : i32
    %c0_i32_1 = arith.constant 0 : i32
    return %arg0, %c0_i32, %c0_i32_0 : i32, i32, i32
  }
}

</mosaic_0001>

<llo_original>
// kernel: step.1
$region0: #{step.1}
  #allocation0 [shape = 'u32[]', space=smem, size = 0x4, offset = 0x4, fixed_abs, tag = 'smem constant byte address 0x4 - core index']
  #allocation1 [shape = 'u32[144,128]{1,0:T(1,128)}', space=vmem, size = 0x12000, scoped, tag = 'internal scratch']
  %s0 = inlined_call_operand.vmem [shape: f32[1,8,512], index: 0, kind: input, shape index: {}]
  %s1 = inlined_call_operand.vmem [shape: f32[1,8,512], index: 1, kind: input, shape index: {}, may-alias: {1,9}]
  %s2 = inlined_call_operand.vmem [shape: f32[8,144], index: 2, kind: input, shape index: {}]
  %s3 = inlined_call_operand.vmem [shape: f32[8,1], index: 3, kind: input, shape index: {}]
  %s4 = inlined_call_operand.vmem [shape: f32[8,72], index: 4, kind: input, shape index: {}]
  %s5 = inlined_call_operand.vmem [shape: f32[8,1], index: 5, kind: input, shape index: {}]
  %s6 = inlined_call_operand.hbm [shape: f32[9,16,512], index: 6, kind: input, shape index: {}]
  %s7 = inlined_call_operand.vmem [shape: f32[9,8,512], index: 7, kind: input, shape index: {}]
  %s8 = inlined_call_operand.vmem [shape: f32[1,8,512], index: 8, kind: output, shape index: {0}]
  %s9 = inlined_call_operand.vmem [shape: f32[1,8,512], index: 9, kind: output, shape index: {1}, may-alias: {1,9}]
  %10 = xla_tuple %s8, %s9
  %s11 = sld [smem:[#allocation0]]
  $region54: #{step.1} parent=0
    _
  %s13 = ssub.s32 1, %s11
  %s14 = scalar_select 0, %s13, %s11
  $region1: #{step.1} parent=0
    #allocation2 [shape = 'u8[294912]{0}', space=vmem, size = 0x48000, scoped, tag = 'input window, operand 6, single buffered']
    #allocation3 [shape = 's32[1]{0}', space=sflag, size = 0x4, scoped, tag = 'scoped memory for step.1']
    %15 = vsyncpa [#allocation3], 0
    // Predicated region
    $region2: #{step.1} parent=1 // pred_check
      _
    $region3: #{step.1} parent=1 // pred_check_branch
      %17 = sbr.rel (0) target = $region5
    $region4: #{step.1} parent=1 // pred_region
      _
    $region5: #{step.1} parent=1 // pred_fallthru
      _
    // Predicated region
    $region6: #{step.1} parent=1 // pred_check
      _
    $region7: #{step.1} parent=1 // pred_check_branch
      %19 = sbr.rel (0) target = $region9
    $region8: #{step.1} parent=1 // pred_region
      _
    $region9: #{step.1} parent=1 // pred_fallthru
      _
    // Predicated region
    $region10: #{step.1} parent=1 // pred_check
      _
    $region11: #{step.1} parent=1 // pred_check_branch
      %21 = sbr.rel (0) target = $region13
    $region12: #{step.1} parent=1 // pred_region
      _
    $region13: #{step.1} parent=1 // pred_fallthru
      _
    // Predicated region
    $region14: #{step.1} parent=1 // pred_check
      _
    $region15: #{step.1} parent=1 // pred_check_branch
      %23 = sbr.rel (0) target = $region17
    $region16: #{step.1} parent=1 // pred_region
      _
    $region17: #{step.1} parent=1 // pred_fallthru
      _
    // Predicated region
    $region18: #{step.1} parent=1 // pred_check
      _
    $region19: #{step.1} parent=1 // pred_check_branch
      %25 = sbr.rel (0) target = $region21
    $region20: #{step.1} parent=1 // pred_region
      _
    $region21: #{step.1} parent=1 // pred_fallthru
      _
    // Predicated region
    $region22: #{step.1} parent=1 // pred_check
      _
    $region23: #{step.1} parent=1 // pred_check_branch
      %27 = sbr.rel (0) target = $region25
    $region24: #{step.1} parent=1 // pred_region
      _
    $region25: #{step.1} parent=1 // pred_fallthru
      _
    // Predicated region
    $region26: #{step.1} parent=1 // pred_check
      _
    $region27: #{step.1} parent=1 // pred_check_branch
      %29 = sbr.rel (0) target = $region29
    $region28: #{step.1} parent=1 // pred_region
      %s31 = ssub.s32 9216, 9216
      %32 = vsyncadd [#allocation3], %s31
      %s33 = sshll.u32 [#allocation2], 4
      %s34 = int_to_ptr.vmem [resolvable:$true] %s33
      %39 = dma.hbm_to_vmem [thread:$0]  %s6, 9216, %s34, [#allocation3], 512, 512, 32
    $region29: #{step.1} parent=1 // pred_fallthru
      _
    // Predicated region
    $region30: #{step.1} parent=1 // pred_check
      _
    $region31: #{step.1} parent=1 // pred_check_branch
      %41 = sbr.rel (0) target = $region33
    $region32: #{step.1} parent=1 // pred_region
      _
    $region33: #{step.1} parent=1 // pred_fallthru
      _
    // Predicated region
    $region34: #{step.1} parent=1 // pred_check
      _
    $region35: #{step.1} parent=1 // pred_check_branch
      %43 = sbr.rel (0) target = $region37
    $region36: #{step.1} parent=1 // pred_region
      %44 = dma.done [#allocation3], 9216
    $region37: #{step.1} parent=1 // pred_fallthru
      _
    %v45 = vld [vmem:[%s0] sm:$0xff]
    %v46 = vld [vmem:[%s0 + $0x8] sm:$0xff]
    %v47 = vld [vmem:[%s0 + $0x10] sm:$0xff]
    %v48 = vld [vmem:[%s0 + $0x18] sm:$0xff]
    %v49 = vld [vmem:[%s1] sm:$0xff]
    %v50 = vld [vmem:[%s1 + $0x8] sm:$0xff]
    %v51 = vld [vmem:[%s1 + $0x10] sm:$0xff]
    %v52 = vld [vmem:[%s1 + $0x18] sm:$0xff]
    %53 = vrot.lane.b32.xlu0 %v45, 17
    %v54 = vpop.permute.xlu0 %53
    %55 = vrot.lane.b32.xlu0 %v49, 17
    %v56 = vpop.permute.xlu0 %55
    %57 = vrot.lane.b32.xlu0 %v46, 17
    %v58 = vpop.permute.xlu0 %57
    %59 = vrot.lane.b32.xlu0 %v50, 17
    %v60 = vpop.permute.xlu0 %59
    %61 = vrot.lane.b32.xlu0 %v47, 17
    %v62 = vpop.permute.xlu0 %61
    %63 = vrot.lane.b32.xlu0 %v51, 17
    %v64 = vpop.permute.xlu0 %63
    %65 = vrot.lane.b32.xlu0 %v48, 17
    %v66 = vpop.permute.xlu0 %65
    %67 = vrot.lane.b32.xlu0 %v52, 17
    %v68 = vpop.permute.xlu0 %67
    %v69 = vlaneseq
    %v70 = vand.u32 %v69, 127
    %vm71 = vcmp.lt.s32.totalorder %v70, 17
    %v72 = vsel %vm71, %v62, %v66
    %v73 = vsel %vm71, %v64, %v68
    %v74 = vsel %vm71, %v58, %v62
    %v75 = vsel %vm71, %v60, %v64
    %v76 = vsel %vm71, %v54, %v58
    %v77 = vsel %vm71, %v56, %v60
    %v78 = vsel %vm71, %v66, %v54
    %v79 = vsel %vm71, %v68, %v56
    %v80 = vld [vmem:[#allocation2] sm:$0xff]
    %v81 = vld [vmem:[#allocation2 + $0x8] sm:$0xff]
    %v82 = vld [vmem:[#allocation2 + $0x10] sm:$0xff]
    %v83 = vld [vmem:[#allocation2 + $0x18] sm:$0xff]
    %v84 = vld [vmem:[#allocation2 + $0x20] sm:$0xff]
    %v85 = vld [vmem:[#allocation2 + $0x28] sm:$0xff]
    %v86 = vld [vmem:[#allocation2 + $0x30] sm:$0xff]
    %v87 = vld [vmem:[#allocation2 + $0x38] sm:$0xff]
    %v88 = vmul.f32 %v80, %v78
    %v89 = vmul.f32 %v81, %v76
    %v90 = vmul.f32 %v82, %v74
    %v91 = vmul.f32 %v83, %v72
    %v92 = vmul.f32 %v84, %v79
    %v93 = vmul.f32 %v85, %v77
    %v94 = vmul.f32 %v86, %v75
    %v95 = vmul.f32 %v87, %v73
    %96 = vrot.lane.b32.xlu0 %v45, 16
    %v97 = vpop.permute.xlu0 %96
    %98 = vrot.lane.b32.xlu0 %v49, 16
    %v99 = vpop.permute.xlu0 %98
    %100 = vrot.lane.b32.xlu0 %v46, 16
    %v101 = vpop.permute.xlu0 %100
    %102 = vrot.lane.b32.xlu0 %v50, 16
    %v103 = vpop.permute.xlu0 %102
    %104 = vrot.lane.b32.xlu0 %v47, 16
    %v105 = vpop.permute.xlu0 %104
    %106 = vrot.lane.b32.xlu0 %v51, 16
    %v107 = vpop.permute.xlu0 %106
    %108 = vrot.lane.b32.xlu0 %v48, 16
    %v109 = vpop.permute.xlu0 %108
    %110 = vrot.lane.b32.xlu0 %v52, 16
    %v111 = vpop.permute.xlu0 %110
    %vm112 = vcmp.lt.s32.totalorder %v70, 16
    %v113 = vsel %vm112, %v105, %v109
    %v114 = vsel %vm112, %v107, %v111
    %v115 = vsel %vm112, %v101, %v105
    %v116 = vsel %vm112, %v103, %v107
    %v117 = vsel %vm112, %v97, %v101
    %v118 = vsel %vm112, %v99, %v103
    %v119 = vsel %vm112, %v109, %v97
    %v120 = vsel %vm112, %v111, %v99
    %s121 = scalar_lea.vmem [#allocation2], 64
    %v122 = vld [vmem:[%s121] sm:$0xff]
    %v123 = vld [vmem:[%s121 + $0x8] sm:$0xff]
    %v124 = vld [vmem:[%s121 + $0x10] sm:$0xff]
    %v125 = vld [vmem:[%s121 + $0x18] sm:$0xff]
    %v126 = vld [vmem:[%s121 + $0x20] sm:$0xff]
    %v127 = vld [vmem:[%s121 + $0x28] sm:$0xff]
    %v128 = vld [vmem:[%s121 + $0x30] sm:$0xff]
    %v129 = vld [vmem:[%s121 + $0x38] sm:$0xff]
    %v130 = vmul.f32 %v122, %v119
    %v131 = vmul.f32 %v123, %v117
    %v132 = vmul.f32 %v124, %v115
    %v133 = vmul.f32 %v125, %v113
    %v134 = vmul.f32 %v126, %v120
    %v135 = vmul.f32 %v127, %v118
    %v136 = vmul.f32 %v128, %v116
    %v137 = vmul.f32 %v129, %v114
    %138 = vrot.lane.b32.xlu0 %v45, 15
    %v139 = vpop.permute.xlu0 %138
    %140 = vrot.lane.b32.xlu0 %v49, 15
    %v141 = vpop.permute.xlu0 %140
    %142 = vrot.lane.b32.xlu0 %v46, 15
    %v143 = vpop.permute.xlu0 %142
    %144 = vrot.lane.b32.xlu0 %v50, 15
    %v145 = vpop.permute.xlu0 %144
    %146 = vrot.lane.b32.xlu0 %v47, 15
    %v147 = vpop.permute.xlu0 %146
    %148 = vrot.lane.b32.xlu0 %v51, 15
    %v149 = vpop.permute.xlu0 %148
    %150 = vrot.lane.b32.xlu0 %v48, 15
    %v151 = vpop.permute.xlu0 %150
    %152 = vrot.lane.b32.xlu0 %v52, 15
    %v153 = vpop.permute.xlu0 %152
    %vm154 = vcmp.lt.s32.totalorder %v70, 15
    %v155 = vsel %vm154, %v147, %v151
    %v156 = vsel %vm154, %v149, %v153
    %v157 = vsel %vm154, %v143, %v147
    %v158 = vsel %vm154, %v145, %v149
    %v159 = vsel %vm154, %v139, %v143
    %v160 = vsel %vm154, %v141, %v145
    %v161 = vsel %vm154, %v151, %v139
    %v162 = vsel %vm154, %v153, %v141
    %s163 = scalar_lea.vmem [#allocation2], 128
    %v164 = vld [vmem:[%s163] sm:$0xff]
    %v165 = vld [vmem:[%s163 + $0x8] sm:$0xff]
    %v166 = vld [vmem:[%s163 + $0x10] sm:$0xff]
    %v167 = vld [vmem:[%s163 + $0x18] sm:$0xff]
    %v168 = vld [vmem:[%s163 + $0x20] sm:$0xff]
    %v169 = vld [vmem:[%s163 + $0x28] sm:$0xff]
    %v170 = vld [vmem:[%s163 + $0x30] sm:$0xff]
    %v171 = vld [vmem:[%s163 + $0x38] sm:$0xff]
    %v172 = vmul.f32 %v164, %v161
    %v173 = vmul.f32 %v165, %v159
    %v174 = vmul.f32 %v166, %v157
    %v175 = vmul.f32 %v167, %v155
    %v176 = vmul.f32 %v168, %v162
    %v177 = vmul.f32 %v169, %v160
    %v178 = vmul.f32 %v170, %v158
    %v179 = vmul.f32 %v171, %v156
    %180 = vrot.lane.b32.xlu0 %v45, 1
    %v181 = vpop.permute.xlu0 %180
    %182 = vrot.lane.b32.xlu0 %v49, 1
    %v183 = vpop.permute.xlu0 %182
    %184 = vrot.lane.b32.xlu0 %v46, 1
    %v185 = vpop.permute.xlu0 %184
    %186 = vrot.lane.b32.xlu0 %v50, 1
    %v187 = vpop.permute.xlu0 %186
    %188 = vrot.lane.b32.xlu0 %v47, 1
    %v189 = vpop.permute.xlu0 %188
    %190 = vrot.lane.b32.xlu0 %v51, 1
    %v191 = vpop.permute.xlu0 %190
    %192 = vrot.lane.b32.xlu0 %v48, 1
    %v193 = vpop.permute.xlu0 %192
    %194 = vrot.lane.b32.xlu0 %v52, 1
    %v195 = vpop.permute.xlu0 %194
    %vm196 = vcmp.lt.s32.totalorder %v70, 1
    %v197 = vsel %vm196, %v189, %v193
    %v198 = vsel %vm196, %v191, %v195
    %v199 = vsel %vm196, %v185, %v189
    %v200 = vsel %vm196, %v187, %v191
    %v201 = vsel %vm196, %v181, %v185
    %v202 = vsel %vm196, %v183, %v187
    %v203 = vsel %vm196, %v193, %v181
    %v204 = vsel %vm196, %v195, %v183
    %s205 = scalar_lea.vmem [#allocation2], 192
    %v206 = vld [vmem:[%s205] sm:$0xff]
    %v207 = vld [vmem:[%s205 + $0x8] sm:$0xff]
    %v208 = vld [vmem:[%s205 + $0x10] sm:$0xff]
    %v209 = vld [vmem:[%s205 + $0x18] sm:$0xff]
    %v210 = vld [vmem:[%s205 + $0x20] sm:$0xff]
    %v211 = vld [vmem:[%s205 + $0x28] sm:$0xff]
    %v212 = vld [vmem:[%s205 + $0x30] sm:$0xff]
    %v213 = vld [vmem:[%s205 + $0x38] sm:$0xff]
    %v214 = vmul.f32 %v206, %v203
    %v215 = vmul.f32 %v207, %v201
    %v216 = vmul.f32 %v208, %v199
    %v217 = vmul.f32 %v209, %v197
    %v218 = vmul.f32 %v210, %v204
    %v219 = vmul.f32 %v211, %v202
    %v220 = vmul.f32 %v212, %v200
    %v221 = vmul.f32 %v213, %v198
    %222 = vrot.lane.b32.xlu0 %v45, 127
    %v223 = vpop.permute.xlu0 %222
    %224 = vrot.lane.b32.xlu0 %v49, 127
    %v225 = vpop.permute.xlu0 %224
    %226 = vrot.lane.b32.xlu0 %v46, 127
    %v227 = vpop.permute.xlu0 %226
    %228 = vrot.lane.b32.xlu0 %v50, 127
    %v229 = vpop.permute.xlu0 %228
    %230 = vrot.lane.b32.xlu0 %v47, 127
    %v231 = vpop.permute.xlu0 %230
    %232 = vrot.lane.b32.xlu0 %v51, 127
    %v233 = vpop.permute.xlu0 %232
    %234 = vrot.lane.b32.xlu0 %v48, 127
    %v235 = vpop.permute.xlu0 %234
    %236 = vrot.lane.b32.xlu0 %v52, 127
    %v237 = vpop.permute.xlu0 %236
    %vm238 = vcmp.lt.s32.totalorder %v70, 127
    %v239 = vsel %vm238, %v231, %v235
    %v240 = vsel %vm238, %v233, %v237
    %v241 = vsel %vm238, %v227, %v231
    %v242 = vsel %vm238, %v229, %v233
    %v243 = vsel %vm238, %v223, %v227
    %v244 = vsel %vm238, %v225, %v229
    %v245 = vsel %vm238, %v235, %v223
    %v246 = vsel %vm238, %v237, %v225
    %s247 = scalar_lea.vmem [#allocation2], 320
    %v248 = vld [vmem:[%s247] sm:$0xff]
    %v249 = vld [vmem:[%s247 + $0x8] sm:$0xff]
    %v250 = vld [vmem:[%s247 + $0x10] sm:$0xff]
    %v251 = vld [vmem:[%s247 + $0x18] sm:$0xff]
    %v252 = vld [vmem:[%s247 + $0x20] sm:$0xff]
    %v253 = vld [vmem:[%s247 + $0x28] sm:$0xff]
    %v254 = vld [vmem:[%s247 + $0x30] sm:$0xff]
    %v255 = vld [vmem:[%s247 + $0x38] sm:$0xff]
    %v256 = vmul.f32 %v248, %v243
    %v257 = vmul.f32 %v249, %v241
    %v258 = vmul.f32 %v250, %v239
    %v259 = vmul.f32 %v251, %v245
    %v260 = vmul.f32 %v252, %v244
    %v261 = vmul.f32 %v253, %v242
    %v262 = vmul.f32 %v254, %v240
    %v263 = vmul.f32 %v255, %v246
    %264 = vrot.lane.b32.xlu0 %v45, 113
    %v265 = vpop.permute.xlu0 %264
    %266 = vrot.lane.b32.xlu0 %v49, 113
    %v267 = vpop.permute.xlu0 %266
    %268 = vrot.lane.b32.xlu0 %v46, 113
    %v269 = vpop.permute.xlu0 %268
    %270 = vrot.lane.b32.xlu0 %v50, 113
    %v271 = vpop.permute.xlu0 %270
    %272 = vrot.lane.b32.xlu0 %v47, 113
    %v273 = vpop.permute.xlu0 %272
    %274 = vrot.lane.b32.xlu0 %v51, 113
    %v275 = vpop.permute.xlu0 %274
    %276 = vrot.lane.b32.xlu0 %v48, 113
    %v277 = vpop.permute.xlu0 %276
    %278 = vrot.lane.b32.xlu0 %v52, 113
    %v279 = vpop.permute.xlu0 %278
    %vm280 = vcmp.lt.s32.totalorder %v70, 113
    %v281 = vsel %vm280, %v273, %v277
    %v282 = vsel %vm280, %v275, %v279
    %v283 = vsel %vm280, %v269, %v273
    %v284 = vsel %vm280, %v271, %v275
    %v285 = vsel %vm280, %v265, %v269
    %v286 = vsel %vm280, %v267, %v271
    %v287 = vsel %vm280, %v277, %v265
    %v288 = vsel %vm280, %v279, %v267
    %s289 = scalar_lea.vmem [#allocation2], 384
    %v290 = vld [vmem:[%s289] sm:$0xff]
    %v291 = vld [vmem:[%s289 + $0x8] sm:$0xff]
    %v292 = vld [vmem:[%s289 + $0x10] sm:$0xff]
    %v293 = vld [vmem:[%s289 + $0x18] sm:$0xff]
    %v294 = vld [vmem:[%s289 + $0x20] sm:$0xff]
    %v295 = vld [vmem:[%s289 + $0x28] sm:$0xff]
    %v296 = vld [vmem:[%s289 + $0x30] sm:$0xff]
    %v297 = vld [vmem:[%s289 + $0x38] sm:$0xff]
    %v298 = vmul.f32 %v290, %v285
    %v299 = vmul.f32 %v291, %v283
    %v300 = vmul.f32 %v292, %v281
    %v301 = vmul.f32 %v293, %v287
    %v302 = vmul.f32 %v294, %v286
    %v303 = vmul.f32 %v295, %v284
    %v304 = vmul.f32 %v296, %v282
    %v305 = vmul.f32 %v297, %v288
    %306 = vrot.lane.b32.xlu0 %v45, 112
    %v307 = vpop.permute.xlu0 %306
    %308 = vrot.lane.b32.xlu0 %v49, 112
    %v309 = vpop.permute.xlu0 %308
    %310 = vrot.lane.b32.xlu0 %v46, 112
    %v311 = vpop.permute.xlu0 %310
    %312 = vrot.lane.b32.xlu0 %v50, 112
    %v313 = vpop.permute.xlu0 %312
    %314 = vrot.lane.b32.xlu0 %v47, 112
    %v315 = vpop.permute.xlu0 %314
    %316 = vrot.lane.b32.xlu0 %v51, 112
    %v317 = vpop.permute.xlu0 %316
    %318 = vrot.lane.b32.xlu0 %v48, 112
    %v319 = vpop.permute.xlu0 %318
    %320 = vrot.lane.b32.xlu0 %v52, 112
    %v321 = vpop.permute.xlu0 %320
    %vm322 = vcmp.lt.s32.totalorder %v70, 112
    %v323 = vsel %vm322, %v315, %v319
    %v324 = vsel %vm322, %v317, %v321
    %v325 = vsel %vm322, %v311, %v315
    %v326 = vsel %vm322, %v313, %v317
    %v327 = vsel %vm322, %v307, %v311
    %v328 = vsel %vm322, %v309, %v313
    %v329 = vsel %vm322, %v319, %v307
    %v330 = vsel %vm322, %v321, %v309
    %s331 = scalar_lea.vmem [#allocation2], 448
    %v332 = vld [vmem:[%s331] sm:$0xff]
    %v333 = vld [vmem:[%s331 + $0x8] sm:$0xff]
    %v334 = vld [vmem:[%s331 + $0x10] sm:$0xff]
    %v335 = vld [vmem:[%s331 + $0x18] sm:$0xff]
    %v336 = vld [vmem:[%s331 + $0x20] sm:$0xff]
    %v337 = vld [vmem:[%s331 + $0x28] sm:$0xff]
    %v338 = vld [vmem:[%s331 + $0x30] sm:$0xff]
    %v339 = vld [vmem:[%s331 + $0x38] sm:$0xff]
    %v340 = vmul.f32 %v332, %v327
    %v341 = vmul.f32 %v333, %v325
    %v342 = vmul.f32 %v334, %v323
    %v343 = vmul.f32 %v335, %v329
    %v344 = vmul.f32 %v336, %v328
    %v345 = vmul.f32 %v337, %v326
    %v346 = vmul.f32 %v338, %v324
    %v347 = vmul.f32 %v339, %v330
    %348 = vrot.lane.b32.xlu0 %v45, 111
    %v349 = vpop.permute.xlu0 %348
    %350 = vrot.lane.b32.xlu0 %v49, 111
    %v351 = vpop.permute.xlu0 %350
    %352 = vrot.lane.b32.xlu0 %v46, 111
    %v353 = vpop.permute.xlu0 %352
    %354 = vrot.lane.b32.xlu0 %v50, 111
    %v355 = vpop.permute.xlu0 %354
    %356 = vrot.lane.b32.xlu0 %v47, 111
    %v357 = vpop.permute.xlu0 %356
    %358 = vrot.lane.b32.xlu0 %v51, 111
    %v359 = vpop.permute.xlu0 %358
    %360 = vrot.lane.b32.xlu0 %v48, 111
    %v361 = vpop.permute.xlu0 %360
    %362 = vrot.lane.b32.xlu0 %v52, 111
    %v363 = vpop.permute.xlu0 %362
    %vm364 = vcmp.lt.s32.totalorder %v70, 111
    %v365 = vsel %vm364, %v357, %v361
    %v366 = vsel %vm364, %v359, %v363
    %v367 = vsel %vm364, %v353, %v357
    %v368 = vsel %vm364, %v355, %v359
    %v369 = vsel %vm364, %v349, %v353
    %v370 = vsel %vm364, %v351, %v355
    %v371 = vsel %vm364, %v361, %v349
    %v372 = vsel %vm364, %v363, %v351
    %s373 = scalar_lea.vmem [#allocation2], 512
    %v374 = vld [vmem:[%s373] sm:$0xff]
    %v375 = vld [vmem:[%s373 + $0x8] sm:$0xff]
    %v376 = vld [vmem:[%s373 + $0x10] sm:$0xff]
    %v377 = vld [vmem:[%s373 + $0x18] sm:$0xff]
    %v378 = vld [vmem:[%s373 + $0x20] sm:$0xff]
    %v379 = vld [vmem:[%s373 + $0x28] sm:$0xff]
    %v380 = vld [vmem:[%s373 + $0x30] sm:$0xff]
    %v381 = vld [vmem:[%s373 + $0x38] sm:$0xff]
    %v382 = vmul.f32 %v374, %v369
    %v383 = vmul.f32 %v375, %v367
    %v384 = vmul.f32 %v376, %v365
    %v385 = vmul.f32 %v377, %v371
    %v386 = vmul.f32 %v378, %v370
    %v387 = vmul.f32 %v379, %v368
    %v388 = vmul.f32 %v380, %v366
    %v389 = vmul.f32 %v381, %v372
    %v390 = vld [vmem:[%s2] sm:$0xff]
    %v391 = vld [vmem:[%s2 + $0x8] sm:$0xff]
    %v392 = vld [vmem:[%s3] sm:$0xff]
    %394 = vset.pattern.permute.xlu0 0
    %395 = vperm.xlu0 %394, %v392
    %v396 = vpop.permute.xlu0 %395
    %vm398 = vcmask 130048
    %v400 = vsel %vm398, %v391, 0
    %402 = vmatprep.subr.mxu0 %v89
    %403 = vmatpush1.msra.mxu0 %v88
    %404 = vmatprep.subr.mxu0 %v93
    %405 = vmatpush1.msra.mxu0 %v92
    %406 = vmatprep.subr.mxu0 %v131
    %407 = vmatpush1.msra.mxu0 %v130
    %408 = vmatprep.subr.mxu0 %v135
    %409 = vmatpush1.msra.mxu0 %v134
    %410 = vmatprep.subr.mxu0 %v173
    %411 = vmatpush1.msra.mxu0 %v172
    %412 = vmatprep.subr.mxu0 %v177
    %413 = vmatpush1.msra.mxu0 %v176
    %414 = vmatprep.subr.mxu0 %v215
    %415 = vmatpush1.msra.mxu0 %v214
    %416 = vmatprep.subr.mxu0 %v219
    %417 = vmatpush1.msra.mxu0 %v218
    %418 = vmatprep.subr.mxu0 %v46
    %419 = vmatpush1.msra.mxu0 %v45
    %420 = vmatprep.subr.mxu0 %v50
    %421 = vmatpush1.msra.mxu0 %v49
    %422 = vmatprep.subr.mxu0 %v257
    %423 = vmatpush1.msra.mxu0 %v256
    %424 = vmatprep.subr.mxu0 %v261
    %425 = vmatpush1.msra.mxu0 %v260
    %426 = vmatprep.subr.mxu0 %v299
    %427 = vmatpush1.msra.mxu0 %v298
    %428 = vmatprep.subr.mxu0 %v303
    %429 = vmatpush1.msra.mxu0 %v302
    %430 = vmatprep.subr.mxu0 %v341
    %431 = vmatpush1.msra.mxu0 %v340
    %432 = vmatprep.subr.mxu0 %v345
    %433 = vmatpush1.msra.mxu0 %v344
    %434 = vmatprep.subr.mxu0 %v383
    %435 = vmatpush1.msra.mxu0 %v382
    %436 = vmatprep.subr.mxu0 %v387
    %437 = vmatpush1.msra.mxu0 %v386
    %438 = vmatprep.subr.mxu0 0.0
    %439 = vmatpush1.msra.mxu0 0.0
    %440 = vmatprep.subr.mxu0 0.0
    %441 = vmatpush1.msra.mxu0 0.0
    %442 = vmatprep.subr.mxu0 0.0
    %443 = vmatpush1.msra.mxu0 0.0
    %444 = vmatprep.subr.mxu0 0.0
    %445 = vmatpush1.msra.mxu0 0.0
    %446 = vmatprep.subr.mxu0 0.0
    %447 = vmatpush1.msra.mxu0 0.0
    %448 = vmatprep.subr.mxu0 0.0
    %449 = vmatpush1.msra.mxu0 0.0
    %450 = vmatprep.subr.mxu0 0.0
    %451 = vmatpush1.msra.mxu0 0.0
    %452 = vmatprep.subr.mxu0 0.0
    %453 = vmatpush1.msra.mxu0 0.0
    %454 = vmatprep.subr.mxu0 0.0
    %455 = vmatpush1.msra.mxu0 0.0
    %456 = vmatprep.subr.mxu0 0.0
    %457 = vmatpush1.msra.mxu0 0.0
    %458 = vmatprep.subr.mxu0 0.0
    %459 = vmatpush1.msra.mxu0 0.0
    %460 = vmatprep.subr.mxu0 0.0
    %461 = vmatpush1.msra.mxu0 0.0
    %462 = vmatprep.subr.mxu0 0.0
    %463 = vmatpush1.msra.mxu0 0.0
    %464 = vmatprep.subr.mxu0 0.0
    %465 = vmatpush1.msra.mxu0 0.0
    %466 = vmatprep.mubr.f32.mxu0 %v400
    %467 = vmatmul.mubr.f32.gmra.mrb[0].mxu0 %v390
    %v468 = vpop.f32.mrb[0].mxu0
    %v469 = vadd.f32 %v396, %v468
    %v470 = vpop.f32.mrb[0].mxu0
    %v471 = vadd.f32 %v396, %v470
    %472 = vdwg.mxu0
    %473 = vmatprep.subr.mxu0 %v91
    %474 = vmatpush1.msra.mxu0 %v90
    %475 = vmatprep.subr.mxu0 %v95
    %476 = vmatpush1.msra.mxu0 %v94
    %477 = vmatprep.subr.mxu0 %v133
    %478 = vmatpush1.msra.mxu0 %v132
    %479 = vmatprep.subr.mxu0 %v137
    %480 = vmatpush1.msra.mxu0 %v136
    %481 = vmatprep.subr.mxu0 %v175
    %482 = vmatpush1.msra.mxu0 %v174
    %483 = vmatprep.subr.mxu0 %v179
    %484 = vmatpush1.msra.mxu0 %v178
    %485 = vmatprep.subr.mxu0 %v217
    %486 = vmatpush1.msra.mxu0 %v216
    %487 = vmatprep.subr.mxu0 %v221
    %488 = vmatpush1.msra.mxu0 %v220
    %489 = vmatprep.subr.mxu0 %v48
    %490 = vmatpush1.msra.mxu0 %v47
    %491 = vmatprep.subr.mxu0 %v52
    %492 = vmatpush1.msra.mxu0 %v51
    %493 = vmatprep.subr.mxu0 %v259
    %494 = vmatpush1.msra.mxu0 %v258
    %495 = vmatprep.subr.mxu0 %v263
    %496 = vmatpush1.msra.mxu0 %v262
    %497 = vmatprep.subr.mxu0 %v301
    %498 = vmatpush1.msra.mxu0 %v300
    %499 = vmatprep.subr.mxu0 %v305
    %500 = vmatpush1.msra.mxu0 %v304
    %501 = vmatprep.subr.mxu0 %v343
    %502 = vmatpush1.msra.mxu0 %v342
    %503 = vmatprep.subr.mxu0 %v347
    %504 = vmatpush1.msra.mxu0 %v346
    %505 = vmatprep.subr.mxu0 %v385
    %506 = vmatpush1.msra.mxu0 %v384
    %507 = vmatprep.subr.mxu0 %v389
    %508 = vmatpush1.msra.mxu0 %v388
    %509 = vmatprep.subr.mxu0 0.0
    %510 = vmatpush1.msra.mxu0 0.0
    %511 = vmatprep.subr.mxu0 0.0
    %512 = vmatpush1.msra.mxu0 0.0
    %513 = vmatprep.subr.mxu0 0.0
    %514 = vmatpush1.msra.mxu0 0.0
    %515 = vmatprep.subr.mxu0 0.0
    %516 = vmatpush1.msra.mxu0 0.0
    %517 = vmatprep.subr.mxu0 0.0
    %518 = vmatpush1.msra.mxu0 0.0
    %519 = vmatprep.subr.mxu0 0.0
    %520 = vmatpush1.msra.mxu0 0.0
    %521 = vmatprep.subr.mxu0 0.0
    %522 = vmatpush1.msra.mxu0 0.0
    %523 = vmatprep.subr.mxu0 0.0
    %524 = vmatpush1.msra.mxu0 0.0
    %525 = vmatprep.subr.mxu0 0.0
    %526 = vmatpush1.msra.mxu0 0.0
    %527 = vmatprep.subr.mxu0 0.0
    %528 = vmatpush1.msra.mxu0 0.0
    %529 = vmatprep.subr.mxu0 0.0
    %530 = vmatpush1.msra.mxu0 0.0
    %531 = vmatprep.subr.mxu0 0.0
    %532 = vmatpush1.msra.mxu0 0.0
    %533 = vmatprep.subr.mxu0 0.0
    %534 = vmatpush1.msra.mxu0 0.0
    %535 = vmatprep.subr.mxu0 0.0
    %536 = vmatpush1.msra.mxu0 0.0
    %537 = vmatprep.mubr.f32.mxu0 %v400
    %538 = vmatmul.mubr.f32.gmra.mrb[0].mxu0 %v390
    %v539 = vpop.f32.mrb[0].mxu0
    %v540 = vadd.f32 %v396, %v539
    %v541 = vpop.f32.mrb[0].mxu0
    %v542 = vadd.f32 %v396, %v541
    %543 = vdwg.mxu0
    %v544 = vtanh.pop %v469
    %v545 = vtanh.pop %v471
    %v546 = vtanh.pop %v540
    %v547 = vtanh.pop %v542
    %548 = vst [vmem:[%s9] sm:$0xff] %v544
    %549 = vst [vmem:[%s9 + $0x8] sm:$0xff] %v545
    %550 = vst [vmem:[%s9 + $0x10] sm:$0xff] %v546
    %551 = vst [vmem:[%s9 + $0x18] sm:$0xff] %v547
    %552 = vrot.lane.b32.xlu0 %v544, 17
    %v553 = vpop.permute.xlu0 %552
    %554 = vrot.lane.b32.xlu0 %v545, 17
    %v555 = vpop.permute.xlu0 %554
    %556 = vrot.lane.b32.xlu0 %v546, 17
    %v557 = vpop.permute.xlu0 %556
    %558 = vrot.lane.b32.xlu0 %v547, 17
    %v559 = vpop.permute.xlu0 %558
    %v560 = vsel %vm71, %v557, %v559
    %v561 = vsel %vm71, %v555, %v557
    %v562 = vsel %vm71, %v553, %v555
    %v563 = vsel %vm71, %v559, %v553
    %v564 = vld [vmem:[%s7] sm:$0xff]
    %v565 = vld [vmem:[%s7 + $0x8] sm:$0xff]
    %v566 = vld [vmem:[%s7 + $0x10] sm:$0xff]
    %v567 = vld [vmem:[%s7 + $0x18] sm:$0xff]
    %v568 = vmul.f32 %v564, %v563
    %v569 = vmul.f32 %v565, %v562
    %v570 = vmul.f32 %v566, %v561
    %v571 = vmul.f32 %v567, %v560
    %572 = vrot.lane.b32.xlu0 %v544, 16
    %v573 = vpop.permute.xlu0 %572
    %574 = vrot.lane.b32.xlu0 %v545, 16
    %v575 = vpop.permute.xlu0 %574
    %576 = vrot.lane.b32.xlu0 %v546, 16
    %v577 = vpop.permute.xlu0 %576
    %578 = vrot.lane.b32.xlu0 %v547, 16
    %v579 = vpop.permute.xlu0 %578
    %v580 = vsel %vm112, %v577, %v579
    %v581 = vsel %vm112, %v575, %v577
    %v582 = vsel %vm112, %v573, %v575
    %v583 = vsel %vm112, %v579, %v573
    %s584 = scalar_lea.vmem %s7, 32
    %v585 = vld [vmem:[%s584] sm:$0xff]
    %v586 = vld [vmem:[%s584 + $0x8] sm:$0xff]
    %v587 = vld [vmem:[%s584 + $0x10] sm:$0xff]
    %v588 = vld [vmem:[%s584 + $0x18] sm:$0xff]
    %v589 = vmul.f32 %v585, %v583
    %v590 = vmul.f32 %v586, %v582
    %v591 = vmul.f32 %v587, %v581
    %v592 = vmul.f32 %v588, %v580
    %593 = vrot.lane.b32.xlu0 %v544, 15
    %v594 = vpop.permute.xlu0 %593
    %595 = vrot.lane.b32.xlu0 %v545, 15
    %v596 = vpop.permute.xlu0 %595
    %597 = vrot.lane.b32.xlu0 %v546, 15
    %v598 = vpop.permute.xlu0 %597
    %599 = vrot.lane.b32.xlu0 %v547, 15
    %v600 = vpop.permute.xlu0 %599
    %v601 = vsel %vm154, %v598, %v600
    %v602 = vsel %vm154, %v596, %v598
    %v603 = vsel %vm154, %v594, %v596
    %v604 = vsel %vm154, %v600, %v594
    %s605 = scalar_lea.vmem %s7, 64
    %v606 = vld [vmem:[%s605] sm:$0xff]
    %v607 = vld [vmem:[%s605 + $0x8] sm:$0xff]
    %v608 = vld [vmem:[%s605 + $0x10] sm:$0xff]
    %v609 = vld [vmem:[%s605 + $0x18] sm:$0xff]
    %v610 = vmul.f32 %v606, %v604
    %v611 = vmul.f32 %v607, %v603
    %v612 = vmul.f32 %v608, %v602
    %v613 = vmul.f32 %v609, %v601
    %614 = vrot.lane.b32.xlu0 %v544, 1
    %v615 = vpop.permute.xlu0 %614
    %616 = vrot.lane.b32.xlu0 %v545, 1
    %v617 = vpop.permute.xlu0 %616
    %618 = vrot.lane.b32.xlu0 %v546, 1
    %v619 = vpop.permute.xlu0 %618
    %620 = vrot.lane.b32.xlu0 %v547, 1
    %v621 = vpop.permute.xlu0 %620
    %v622 = vsel %vm196, %v619, %v621
    %v623 = vsel %vm196, %v617, %v619
    %v624 = vsel %vm196, %v615, %v617
    %v625 = vsel %vm196, %v621, %v615
    %s626 = scalar_lea.vmem %s7, 96
    %v627 = vld [vmem:[%s626] sm:$0xff]
    %v628 = vld [vmem:[%s626 + $0x8] sm:$0xff]
    %v629 = vld [vmem:[%s626 + $0x10] sm:$0xff]
    %v630 = vld [vmem:[%s626 + $0x18] sm:$0xff]
    %v631 = vmul.f32 %v627, %v625
    %v632 = vmul.f32 %v628, %v624
    %v633 = vmul.f32 %v629, %v623
    %v634 = vmul.f32 %v630, %v622
    %635 = vrot.lane.b32.xlu0 %v544, 127
    %v636 = vpop.permute.xlu0 %635
    %637 = vrot.lane.b32.xlu0 %v545, 127
    %v638 = vpop.permute.xlu0 %637
    %639 = vrot.lane.b32.xlu0 %v546, 127
    %v640 = vpop.permute.xlu0 %639
    %641 = vrot.lane.b32.xlu0 %v547, 127
    %v642 = vpop.permute.xlu0 %641
    %v643 = vsel %vm238, %v640, %v642
    %v644 = vsel %vm238, %v638, %v640
    %v645 = vsel %vm238, %v636, %v638
    %v646 = vsel %vm238, %v642, %v636
    %s647 = scalar_lea.vmem %s7, 160
    %v648 = vld [vmem:[%s647] sm:$0xff]
    %v649 = vld [vmem:[%s647 + $0x8] sm:$0xff]
    %v650 = vld [vmem:[%s647 + $0x10] sm:$0xff]
    %v651 = vld [vmem:[%s647 + $0x18] sm:$0xff]
    %v652 = vmul.f32 %v648, %v645
    %v653 = vmul.f32 %v649, %v644
    %v654 = vmul.f32 %v650, %v643
    %v655 = vmul.f32 %v651, %v646
    %656 = vrot.lane.b32.xlu0 %v544, 113
    %v657 = vpop.permute.xlu0 %656
    %658 = vrot.lane.b32.xlu0 %v545, 113
    %v659 = vpop.permute.xlu0 %658
    %660 = vrot.lane.b32.xlu0 %v546, 113
    %v661 = vpop.permute.xlu0 %660
    %662 = vrot.lane.b32.xlu0 %v547, 113
    %v663 = vpop.permute.xlu0 %662
    %v664 = vsel %vm280, %v661, %v663
    %v665 = vsel %vm280, %v659, %v661
    %v666 = vsel %vm280, %v657, %v659
    %v667 = vsel %vm280, %v663, %v657
    %s668 = scalar_lea.vmem %s7, 192
    %v669 = vld [vmem:[%s668] sm:$0xff]
    %v670 = vld [vmem:[%s668 + $0x8] sm:$0xff]
    %v671 = vld [vmem:[%s668 + $0x10] sm:$0xff]
    %v672 = vld [vmem:[%s668 + $0x18] sm:$0xff]
    %v673 = vmul.f32 %v669, %v666
    %v674 = vmul.f32 %v670, %v665
    %v675 = vmul.f32 %v671, %v664
    %v676 = vmul.f32 %v672, %v667
    %677 = vrot.lane.b32.xlu0 %v544, 112
    %v678 = vpop.permute.xlu0 %677
    %679 = vrot.lane.b32.xlu0 %v545, 112
    %v680 = vpop.permute.xlu0 %679
    %681 = vrot.lane.b32.xlu0 %v546, 112
    %v682 = vpop.permute.xlu0 %681
    %683 = vrot.lane.b32.xlu0 %v547, 112
    %v684 = vpop.permute.xlu0 %683
    %v685 = vsel %vm322, %v682, %v684
    %v686 = vsel %vm322, %v680, %v682
    %v687 = vsel %vm322, %v678, %v680
    %v688 = vsel %vm322, %v684, %v678
    %s689 = scalar_lea.vmem %s7, 224
    %v690 = vld [vmem:[%s689] sm:$0xff]
    %v691 = vld [vmem:[%s689 + $0x8] sm:$0xff]
    %v692 = vld [vmem:[%s689 + $0x10] sm:$0xff]
    %v693 = vld [vmem:[%s689 + $0x18] sm:$0xff]
    %v694 = vmul.f32 %v690, %v687
    %v695 = vmul.f32 %v691, %v686
    %v696 = vmul.f32 %v692, %v685
    %v697 = vmul.f32 %v693, %v688
    %698 = vrot.lane.b32.xlu0 %v544, 111
    %v699 = vpop.permute.xlu0 %698
    %700 = vrot.lane.b32.xlu0 %v545, 111
    %v701 = vpop.permute.xlu0 %700
    %702 = vrot.lane.b32.xlu0 %v546, 111
    %v703 = vpop.permute.xlu0 %702
    %704 = vrot.lane.b32.xlu0 %v547, 111
    %v705 = vpop.permute.xlu0 %704
    %v706 = vsel %vm364, %v703, %v705
    %v707 = vsel %vm364, %v701, %v703
    %v708 = vsel %vm364, %v699, %v701
    %v709 = vsel %vm364, %v705, %v699
    %s710 = scalar_lea.vmem %s7, 256
    %v711 = vld [vmem:[%s710] sm:$0xff]
    %v712 = vld [vmem:[%s710 + $0x8] sm:$0xff]
    %v713 = vld [vmem:[%s710 + $0x10] sm:$0xff]
    %v714 = vld [vmem:[%s710 + $0x18] sm:$0xff]
    %v715 = vmul.f32 %v711, %v708
    %v716 = vmul.f32 %v712, %v707
    %v717 = vmul.f32 %v713, %v706
    %v718 = vmul.f32 %v714, %v709
    %v719 = vld [vmem:[%s4] sm:$0xff]
    %v720 = vld [vmem:[%s5] sm:$0xff]
    %722 = vset.pattern.permute.xlu0 0
    %723 = vperm.xlu0 %722, %v720
    %v724 = vpop.permute.xlu0 %723
    %vm726 = vcmask 588800
    %v728 = vsel %vm726, %v719, 0
    %730 = vmatprep.subr.mxu0 %v569
    %731 = vmatpush1.msra.mxu0 %v568
    %732 = vmatprep.subr.mxu0 %v590
    %733 = vmatpush1.msra.mxu0 %v589
    %734 = vmatprep.subr.mxu0 %v611
    %735 = vmatpush1.msra.mxu0 %v610
    %736 = vmatprep.subr.mxu0 %v632
    %737 = vmatpush1.msra.mxu0 %v631
    %738 = vmatprep.subr.mxu0 %v545
    %739 = vmatpush1.msra.mxu0 %v544
    %740 = vmatprep.subr.mxu0 %v653
    %741 = vmatpush1.msra.mxu0 %v652
    %742 = vmatprep.subr.mxu0 %v674
    %743 = vmatpush1.msra.mxu0 %v673
    %744 = vmatprep.subr.mxu0 %v695
    %745 = vmatpush1.msra.mxu0 %v694
    %746 = vmatprep.subr.mxu0 %v716
    %747 = vmatpush1.msra.mxu0 %v715
    %748 = vmatprep.subr.mxu0 0.0
    %749 = vmatpush1.msra.mxu0 0.0
    %750 = vmatprep.subr.mxu0 0.0
    %751 = vmatpush1.msra.mxu0 0.0
    %752 = vmatprep.subr.mxu0 0.0
    %753 = vmatpush1.msra.mxu0 0.0
    %754 = vmatprep.subr.mxu0 0.0
    %755 = vmatpush1.msra.mxu0 0.0
    %756 = vmatprep.subr.mxu0 0.0
    %757 = vmatpush1.msra.mxu0 0.0
    %758 = vmatprep.subr.mxu0 0.0
    %759 = vmatpush1.msra.mxu0 0.0
    %760 = vmatprep.subr.mxu0 0.0
    %761 = vmatpush1.msra.mxu0 0.0
    %762 = vmatprep.subr.mxu0 0.0
    %763 = vmatpush1.msra.mxu0 0.0
    %764 = vmatprep.subr.mxu0 0.0
    %765 = vmatpush1.msra.mxu0 0.0
    %766 = vmatprep.subr.mxu0 0.0
    %767 = vmatpush1.msra.mxu0 0.0
    %768 = vmatprep.subr.mxu0 0.0
    %769 = vmatpush1.msra.mxu0 0.0
    %770 = vmatprep.subr.mxu0 0.0
    %771 = vmatpush1.msra.mxu0 0.0
    %772 = vmatprep.subr.mxu0 0.0
    %773 = vmatpush1.msra.mxu0 0.0
    %774 = vmatprep.subr.mxu0 0.0
    %775 = vmatpush1.msra.mxu0 0.0
    %776 = vmatprep.subr.mxu0 0.0
    %777 = vmatpush1.msra.mxu0 0.0
    %778 = vmatprep.subr.mxu0 0.0
    %779 = vmatpush1.msra.mxu0 0.0
    %780 = vmatprep.subr.mxu0 0.0
    %781 = vmatpush1.msra.mxu0 0.0
    %782 = vmatprep.subr.mxu0 0.0
    %783 = vmatpush1.msra.mxu0 0.0
    %784 = vmatprep.subr.mxu0 0.0
    %785 = vmatpush1.msra.mxu0 0.0
    %786 = vmatprep.subr.mxu0 0.0
    %787 = vmatpush1.msra.mxu0 0.0
    %788 = vmatprep.subr.mxu0 0.0
    %789 = vmatpush1.msra.mxu0 0.0
    %790 = vmatprep.subr.mxu0 0.0
    %791 = vmatpush1.msra.mxu0 0.0
    %792 = vmatprep.subr.mxu0 0.0
    %793 = vmatpush1.msra.mxu0 0.0
    %794 = vmatprep.mubr.f32.mxu0 0.0
    %795 = vmatmul.mubr.f32.gmra.mrb[0].mxu0 %v728
    %v796 = vpop.f32.mrb[0].mxu0
    %v797 = vadd.f32 %v724, %v796
    %v798 = vpop.f32.mrb[0].mxu0
    %v799 = vadd.f32 %v724, %v798
    %800 = vdwg.mxu0
    %801 = vmatprep.subr.mxu0 %v571
    %802 = vmatpush1.msra.mxu0 %v570
    %803 = vmatprep.subr.mxu0 %v592
    %804 = vmatpush1.msra.mxu0 %v591
    %805 = vmatprep.subr.mxu0 %v613
    %806 = vmatpush1.msra.mxu0 %v612
    %807 = vmatprep.subr.mxu0 %v634
    %808 = vmatpush1.msra.mxu0 %v633
    %809 = vmatprep.subr.mxu0 %v547
    %810 = vmatpush1.msra.mxu0 %v546
    %811 = vmatprep.subr.mxu0 %v655
    %812 = vmatpush1.msra.mxu0 %v654
    %813 = vmatprep.subr.mxu0 %v676
    %814 = vmatpush1.msra.mxu0 %v675
    %815 = vmatprep.subr.mxu0 %v697
    %816 = vmatpush1.msra.mxu0 %v696
    %817 = vmatprep.subr.mxu0 %v718
    %818 = vmatpush1.msra.mxu0 %v717
    %819 = vmatprep.subr.mxu0 0.0
    %820 = vmatpush1.msra.mxu0 0.0
    %821 = vmatprep.subr.mxu0 0.0
    %822 = vmatpush1.msra.mxu0 0.0
    %823 = vmatprep.subr.mxu0 0.0
    %824 = vmatpush1.msra.mxu0 0.0
    %825 = vmatprep.subr.mxu0 0.0
    %826 = vmatpush1.msra.mxu0 0.0
    %827 = vmatprep.subr.mxu0 0.0
    %828 = vmatpush1.msra.mxu0 0.0
    %829 = vmatprep.subr.mxu0 0.0
    %830 = vmatpush1.msra.mxu0 0.0
    %831 = vmatprep.subr.mxu0 0.0
    %832 = vmatpush1.msra.mxu0 0.0
    %833 = vmatprep.subr.mxu0 0.0
    %834 = vmatpush1.msra.mxu0 0.0
    %835 = vmatprep.subr.mxu0 0.0
    %836 = vmatpush1.msra.mxu0 0.0
    %837 = vmatprep.subr.mxu0 0.0
    %838 = vmatpush1.msra.mxu0 0.0
    %839 = vmatprep.subr.mxu0 0.0
    %840 = vmatpush1.msra.mxu0 0.0
    %841 = vmatprep.subr.mxu0 0.0
    %842 = vmatpush1.msra.mxu0 0.0
    %843 = vmatprep.subr.mxu0 0.0
    %844 = vmatpush1.msra.mxu0 0.0
    %845 = vmatprep.subr.mxu0 0.0
    %846 = vmatpush1.msra.mxu0 0.0
    %847 = vmatprep.subr.mxu0 0.0
    %848 = vmatpush1.msra.mxu0 0.0
    %849 = vmatprep.subr.mxu0 0.0
    %850 = vmatpush1.msra.mxu0 0.0
    %851 = vmatprep.subr.mxu0 0.0
    %852 = vmatpush1.msra.mxu0 0.0
    %853 = vmatprep.subr.mxu0 0.0
    %854 = vmatpush1.msra.mxu0 0.0
    %855 = vmatprep.subr.mxu0 0.0
    %856 = vmatpush1.msra.mxu0 0.0
    %857 = vmatprep.subr.mxu0 0.0
    %858 = vmatpush1.msra.mxu0 0.0
    %859 = vmatprep.subr.mxu0 0.0
    %860 = vmatpush1.msra.mxu0 0.0
    %861 = vmatprep.subr.mxu0 0.0
    %862 = vmatpush1.msra.mxu0 0.0
    %863 = vmatprep.subr.mxu0 0.0
    %864 = vmatpush1.msra.mxu0 0.0
    %865 = vmatprep.mubr.f32.mxu0 0.0
    %866 = vmatmul.mubr.f32.gmra.mrb[0].mxu0 %v728
    %v867 = vpop.f32.mrb[0].mxu0
    %v868 = vadd.f32 %v724, %v867
    %v869 = vpop.f32.mrb[0].mxu0
    %v870 = vadd.f32 %v724, %v869
    %871 = vdwg.mxu0
    %v872 = vmax.f32 %v797, 0.0
    %v873 = vmax.f32 %v799, 0.0
    %v874 = vmax.f32 %v868, 0.0
    %v875 = vmax.f32 %v870, 0.0
    %876 = vst [vmem:[%s8] sm:$0xff] %v872
    %877 = vst [vmem:[%s8 + $0x8] sm:$0xff] %v873
    %878 = vst [vmem:[%s8 + $0x10] sm:$0xff] %v874
    %879 = vst [vmem:[%s8 + $0x18] sm:$0xff] %v875
    // Predicated region
    $region38: #{step.1} parent=1 // pred_check
      _
    $region39: #{step.1} parent=1 // pred_check_branch
      %881 = sbr.rel (0) target = $region41
    $region40: #{step.1} parent=1 // pred_region
      _
    $region41: #{step.1} parent=1 // pred_fallthru
      _
    // Predicated region
    $region42: #{step.1} parent=1 // pred_check
      _
    $region43: #{step.1} parent=1 // pred_check_branch
      %883 = sbr.rel (0) target = $region45
    $region44: #{step.1} parent=1 // pred_region
      _
    $region45: #{step.1} parent=1 // pred_fallthru
      _
    // Predicated region
    $region46: #{step.1} parent=1 // pred_check
      _
    $region47: #{step.1} parent=1 // pred_check_branch
      %885 = sbr.rel (0) target = $region49
    $region48: #{step.1} parent=1 // pred_region
      _
    $region49: #{step.1} parent=1 // pred_fallthru
      _
    // Predicated region
    $region50: #{step.1} parent=1 // pred_check
      _
    $region51: #{step.1} parent=1 // pred_check_branch
      %887 = sbr.rel (0) target = $region53
    $region52: #{step.1} parent=1 // pred_region
      _
    $region53: #{step.1} parent=1 // pred_fallthru
      _
    %888 = vsyncpa [#allocation3], 1

</llo_original>
